<compile_context>
chip_gen: v7x
topology: tpu7x:2x2x1
jax: 0.10.0
libtpu: 0.0.40
codegen_flags: <defaults>
</compile_context>

<pallas_src>
import jax
import jax.numpy as jnp
from jax import lax
from jax.experimental import pallas as pl
from jax.experimental.pallas import tpu as pltpu


def bottleneck_kernel(x_ref, w1_ref, b1_ref, w2a_ref, w2b_ref, w2c_ref,
                      b2_ref, w3_ref, b3_ref, o_ref):
    nb, H, WC = x_ref.shape            # lane-dense input block: (nb, H, W*Cin)
    WW = w1_ref.shape[1]               # W * width
    M = nb * H                         # matmul rows

    x = x_ref[...].reshape(M, WC)                        # f32, residual path
    x_bf = x.astype(jnp.bfloat16)

    # ---- conv1 (1x1) + bn1 (scale folded into w1) + relu -----------------
    h1 = jnp.dot(x_bf, w1_ref[...], preferred_element_type=jnp.float32)
    h1 = jnp.maximum(h1 + b1_ref[...], 0.0)              # (M, WW) f32
    h1_bf = h1.astype(jnp.bfloat16)

    # ---- conv2 (3x3, stride=1, pad=1) + bn2 + relu -----------------------
    # Horizontal taps + channel mixing live in three banded (WW, WW) blocks
    # (one per vertical tap) -> three small MXU dots that accumulate in f32.
    # Vertical taps: roll the partial results along the row (sublane) axis
    # and zero the rows that wrapped across an image boundary.
    pA = jnp.dot(h1_bf, w2a_ref[...], preferred_element_type=jnp.float32)  # y-1
    pB = jnp.dot(h1_bf, w2b_ref[...], preferred_element_type=jnp.float32)  # y
    pC = jnp.dot(h1_bf, w2c_ref[...], preferred_element_type=jnp.float32)  # y+1

    row = lax.broadcasted_iota(jnp.int32, (M, WW), 0)
    up = jnp.where((row % H) == 0, 0.0,
                   pltpu.roll(pA, shift=1, axis=0))       # contrib from y-1
    dn = jnp.where((row % H) == (H - 1), 0.0,
                   pltpu.roll(pC, shift=M - 1, axis=0))   # contrib from y+1
    h2 = jnp.maximum(pB + up + dn + b2_ref[...], 0.0)     # (M, WW) f32
    h2_bf = h2.astype(jnp.bfloat16)

    # ---- conv3 (1x1) + bn3 + residual add + relu -------------------------
    h3 = jnp.dot(h2_bf, w3_ref[...], preferred_element_type=jnp.float32)
    out = jnp.maximum(h3 + b3_ref[...] + x, 0.0)          # (M, W*Cout) f32
    o_ref[...] = out.reshape(nb, H, WC).astype(o_ref.dtype)


def pack_params(w1, s1, b1, w2, s2, b2, w3, s3, b3, W):
    """Fold BN scales into conv weights, pack lane-dense, cast matmul weights
    to bf16 (biases stay f32).  Host side, runs once."""
    Cin, width = w1.shape
    Cout = w3.shape[1]

    # BN scale folding (inference-mode BN).
    w1f = (w1 * s1.reshape(1, width)).astype(jnp.float32)        # (Cin, width)
    w2f = (w2 * s2.reshape(1, 1, 1, width)).astype(jnp.float32)  # (3,3,ci,co)
    w3f = (w3 * s3.reshape(1, Cout)).astype(jnp.float32)         # (width, Cout)

    # 1x1 convs -> W-block-diagonal matmul weights acting on lane-dense rows.
    eye = jnp.eye(W, dtype=jnp.float32)
    w1_blk = jnp.einsum('xy,io->xiyo', eye, w1f).reshape(W * Cin, W * width)
    w3_blk = jnp.einsum('xy,io->xiyo', eye, w3f).reshape(W * width, W * Cout)

    # 3x3 conv -> three banded (W*width, W*width) blocks over the lane (W)
    # dimension, one per vertical tap [y-1, y, y+1].
    x_in = jnp.arange(W)[:, None]
    x_out = jnp.arange(W)[None, :]
    dx = x_in - x_out + 1                                    # (W, W)
    valid = ((dx >= 0) & (dx <= 2)).astype(jnp.float32)
    dx_c = jnp.clip(dx, 0, 2)
    w2_blocks = []
    for dy in range(3):
        blk = w2f[dy][dx_c] * valid[:, :, None, None]        # (W, W, ci, co)
        w2_blocks.append(
            jnp.transpose(blk, (0, 2, 1, 3))
            .reshape(W * width, W * width).astype(jnp.bfloat16))

    # Lane-dense per-channel biases (column j = x*C + c -> bias[c]).
    b1_ld = jnp.tile(b1.reshape(1, width), (1, W)).astype(jnp.float32)
    b2_ld = jnp.tile(b2.reshape(1, width), (1, W)).astype(jnp.float32)
    b3_ld = jnp.tile(b3.reshape(1, Cout), (1, W)).astype(jnp.float32)

    return (w1_blk.astype(jnp.bfloat16), b1_ld,
            w2_blocks[0], w2_blocks[1], w2_blocks[2], b2_ld,
            w3_blk.astype(jnp.bfloat16), b3_ld)


def bottleneck_forward(x_nhwc, packed):
    """x_nhwc: (N, H, W, Cin) float32. packed: output of pack_params."""
    w1_blk, b1_ld, w2a, w2b, w2c, b2_ld, w3_blk, b3_ld = packed
    N, H, W, Cin = x_nhwc.shape
    Cout = w3_blk.shape[1] // W
    assert Cout == Cin, "identity path requires inplanes == planes * expansion"

    # Lane-dense view: last dim = W*Cin (128 here). Pure metadata reshape.
    x_ld = x_nhwc.reshape(N, H, W * Cin)

    # Megacore split is gated on work size: only shard the batch across two
    # grid steps when each step still gets >= 256 matmul rows; otherwise a
    # single step avoids per-step overhead and keeps the MXU M dim as big as
    # possible (grid is a sequential loop on single-TC v5e/v6e anyway).
    if N % 2 == 0 and (N // 2) * H >= 256:
        nb, steps = N // 2, 2
    else:
        nb, steps = N, 1

    def full(shape):
        r = len(shape)
        return pl.BlockSpec(shape, lambda n, _r=r: (0,) * _r)

    out_ld = pl.pallas_call(
        bottleneck_kernel,
        out_shape=jax.ShapeDtypeStruct((N, H, W * Cout), x_nhwc.dtype),
        grid_spec=pltpu.PrefetchScalarGridSpec(
            num_scalar_prefetch=0,
            grid=(steps,),
            in_specs=[
                pl.BlockSpec((nb, H, W * Cin), lambda n: (n, 0, 0)),
                full(w1_blk.shape), full(b1_ld.shape),
                full(w2a.shape), full(w2b.shape), full(w2c.shape),
                full(b2_ld.shape),
                full(w3_blk.shape), full(b3_ld.shape),
            ],
            out_specs=pl.BlockSpec((nb, H, W * Cout), lambda n: (n, 0, 0)),
        ),
        compiler_params=pltpu.CompilerParams(
            dimension_semantics=("parallel",)),
    )(x_ld, w1_blk, b1_ld, w2a, w2b, w2c, b2_ld, w3_blk, b3_ld)

    return out_ld.reshape(N, H, W, Cout)


def ref_bottleneck(x, w1, s1, b1, w2, s2, b2, w3, s3, b3):
    """Pure-JAX f32 reference (NHWC, unfolded params)."""
    h = jnp.einsum('nhwi,io->nhwo', x, w1)
    h = jnp.maximum(h * s1 + b1, 0.0)
    h = lax.conv_general_dilated(h, w2, window_strides=(1, 1),
                                 padding=((1, 1), (1, 1)),
                                 dimension_numbers=('NHWC', 'HWIO', 'NHWC'))
    h = jnp.maximum(h * s2 + b2, 0.0)
    h = jnp.einsum('nhwi,io->nhwo', h, w3)
    h = h * s3 + b3
    return jnp.maximum(h + x, 0.0)


if __name__ == "__main__":
    # Module hyper-params: inplanes=16, planes=4 -> width=4, out=planes*4=16.
    N, H, W = 2, 8, 8
    inplanes, planes = 16, 4
    width = int(planes * (64 / 64.0)) * 1        # = 4
    Cout = planes * 4                            # expansion = 4 -> 16
    assert Cout == inplanes

    key = jax.random.PRNGKey(0)
    ks = jax.random.split(key, 16)

    # PyTorch-style NCHW input, transposed to NHWC for the kernel.
    x_nchw = jax.random.normal(ks[0], (N, inplanes, H, W), jnp.float32)
    x = jnp.transpose(x_nchw, (0, 2, 3, 1))

    def bn_fold(kg, kb, km, kv, c, eps=1e-5):
        gamma = 1.0 + 0.1 * jax.random.normal(kg, (c,))
        beta = 0.1 * jax.random.normal(kb, (c,))
        mean = 0.1 * jax.random.normal(km, (c,))
        var = jax.random.uniform(kv, (c,), minval=0.5, maxval=1.5)
        scale = gamma / jnp.sqrt(var + eps)
        bias = beta - mean * scale
        return (scale.reshape(1, c).astype(jnp.float32),
                bias.reshape(1, c).astype(jnp.float32))

    w1 = (0.2 * jax.random.normal(ks[1], (inplanes, width))).astype(jnp.float32)
    s1, b1 = bn_fold(ks[2], ks[3], ks[4], ks[5], width)
    w2 = (0.2 * jax.random.normal(ks[6], (3, 3, width, width))).astype(jnp.float32)
    s2, b2 = bn_fold(ks[7], ks[8], ks[9], ks[10], width)
    w3 = (0.2 * jax.random.normal(ks[11], (width, Cout))).astype(jnp.float32)
    s3, b3 = bn_fold(ks[12], ks[13], ks[14], ks[15], Cout)

    packed = pack_params(w1, s1, b1, w2, s2, b2, w3, s3, b3, W)

    out = bottleneck_forward(x, packed)
    out = jax.block_until_ready(out)

    ref = ref_bottleneck(x, w1, s1, b1, w2, s2, b2, w3, s3, b3)
    assert out.shape == (N, H, W, Cout)
    # bf16 matmul operands (f32 accumulation) -> loosened tolerance.
    assert jnp.allclose(out, ref, atol=1e-1, rtol=5e-2), "mismatch vs reference"

    print("KERNEL_OK")
</pallas_src>

<mosaic_0001>
module attributes {stable_mosaic.version = 11 : i64} {
  func.func @bottleneck_kernel(%arg0: i32, %arg1: memref<2x8x128xf32, #tpu.memory_space<vmem>>, %arg2: memref<128x32xbf16, #tpu.memory_space<vmem>>, %arg3: memref<1x32xf32, #tpu.memory_space<vmem>>, %arg4: memref<32x32xbf16, #tpu.memory_space<vmem>>, %arg5: memref<32x32xbf16, #tpu.memory_space<vmem>>, %arg6: memref<32x32xbf16, #tpu.memory_space<vmem>>, %arg7: memref<1x32xf32, #tpu.memory_space<vmem>>, %arg8: memref<32x128xbf16, #tpu.memory_space<vmem>>, %arg9: memref<1x128xf32, #tpu.memory_space<vmem>>, %arg10: memref<2x8x128xf32, #tpu.memory_space<vmem>>) attributes {dimension_semantics = [#tpu.dimension_semantics<parallel>], iteration_bounds = array<i64: 1>, scalar_prefetch = 0 : i64, scratch_operands = 0 : i64, tpu.core_type = #tpu.core_type<tc>, window_params = [{transform_indices = @transform_0, window_bounds = array<i64: 2, 8, 128>}, {pipeline_mode = #tpu.pipeline_mode<synchronous>, transform_indices = @transform_1, window_bounds = array<i64: 128, 32>}, {pipeline_mode = #tpu.pipeline_mode<synchronous>, transform_indices = @transform_2, window_bounds = array<i64: 1, 32>}, {pipeline_mode = #tpu.pipeline_mode<synchronous>, transform_indices = @transform_3, window_bounds = array<i64: 32, 32>}, {pipeline_mode = #tpu.pipeline_mode<synchronous>, transform_indices = @transform_4, window_bounds = array<i64: 32, 32>}, {pipeline_mode = #tpu.pipeline_mode<synchronous>, transform_indices = @transform_5, window_bounds = array<i64: 32, 32>}, {pipeline_mode = #tpu.pipeline_mode<synchronous>, transform_indices = @transform_6, window_bounds = array<i64: 1, 32>}, {pipeline_mode = #tpu.pipeline_mode<synchronous>, transform_indices = @transform_7, window_bounds = array<i64: 32, 128>}, {pipeline_mode = #tpu.pipeline_mode<synchronous>, transform_indices = @transform_8, window_bounds = array<i64: 1, 128>}, {transform_indices = @transform_9, window_bounds = array<i64: 2, 8, 128>}]} {
    %c0 = arith.constant 0 : index
    %c0_0 = arith.constant 0 : index
    %c0_1 = arith.constant 0 : index
    %0 = vector.load %arg1[%c0, %c0_0, %c0_1] : memref<2x8x128xf32, #tpu.memory_space<vmem>>, vector<2x8x128xf32>
    %1 = vector.shape_cast %0 : vector<2x8x128xf32> to vector<16x128xf32>
    %2 = arith.truncf %1 : vector<16x128xf32> to vector<16x128xbf16>
    %c0_2 = arith.constant 0 : index
    %c0_3 = arith.constant 0 : index
    %3 = vector.load %arg2[%c0_2, %c0_3] : memref<128x32xbf16, #tpu.memory_space<vmem>>, vector<128x32xbf16>
    %cst = arith.constant dense<0.000000e+00> : vector<16x32xf32>
    %4 = tpu.matmul %2, %3, %cst {dimension_numbers = #tpu.dot_dimension_numbers<[1], [0], [0], [1], [0, 0, 1, 1], [], []>} : vector<16x128xbf16>, vector<128x32xbf16>, vector<16x32xf32> -> vector<16x32xf32>
    %c0_4 = arith.constant 0 : index
    %c0_5 = arith.constant 0 : index
    %5 = vector.load %arg3[%c0_4, %c0_5] : memref<1x32xf32, #tpu.memory_space<vmem>>, vector<1x32xf32>
    %6 = vector.broadcast %5 : vector<1x32xf32> to vector<16x32xf32>
    %7 = arith.addf %4, %6 : vector<16x32xf32>
    %cst_6 = arith.constant 0.000000e+00 : f32
    %8 = vector.broadcast %cst_6 : f32 to vector<16x32xf32>
    %9 = arith.maximumf %7, %8 : vector<16x32xf32>
    %10 = arith.truncf %9 : vector<16x32xf32> to vector<16x32xbf16>
    %c0_7 = arith.constant 0 : index
    %c0_8 = arith.constant 0 : index
    %11 = vector.load %arg4[%c0_7, %c0_8] : memref<32x32xbf16, #tpu.memory_space<vmem>>, vector<32x32xbf16>
    %cst_9 = arith.constant dense<0.000000e+00> : vector<16x32xf32>
    %12 = tpu.matmul %10, %11, %cst_9 {dimension_numbers = #tpu.dot_dimension_numbers<[1], [0], [0], [1], [0, 0, 1, 1], [], []>} : vector<16x32xbf16>, vector<32x32xbf16>, vector<16x32xf32> -> vector<16x32xf32>
    %c0_10 = arith.constant 0 : index
    %c0_11 = arith.constant 0 : index
    %13 = vector.load %arg5[%c0_10, %c0_11] : memref<32x32xbf16, #tpu.memory_space<vmem>>, vector<32x32xbf16>
    %cst_12 = arith.constant dense<0.000000e+00> : vector<16x32xf32>
    %14 = tpu.matmul %10, %13, %cst_12 {dimension_numbers = #tpu.dot_dimension_numbers<[1], [0], [0], [1], [0, 0, 1, 1], [], []>} : vector<16x32xbf16>, vector<32x32xbf16>, vector<16x32xf32> -> vector<16x32xf32>
    %c0_13 = arith.constant 0 : index
    %c0_14 = arith.constant 0 : index
    %15 = vector.load %arg6[%c0_13, %c0_14] : memref<32x32xbf16, #tpu.memory_space<vmem>>, vector<32x32xbf16>
    %cst_15 = arith.constant dense<0.000000e+00> : vector<16x32xf32>
    %16 = tpu.matmul %10, %15, %cst_15 {dimension_numbers = #tpu.dot_dimension_numbers<[1], [0], [0], [1], [0, 0, 1, 1], [], []>} : vector<16x32xbf16>, vector<32x32xbf16>, vector<16x32xf32> -> vector<16x32xf32>
    %17 = tpu.iota {dimensions = array<i32: 0>} : vector<16x32xi32>
    %c8_i32 = arith.constant 8 : i32
    %c0_i32 = arith.constant 0 : i32
    %18 = arith.cmpi eq, %c8_i32, %c0_i32 : i32
    %c1_i32 = arith.constant 1 : i32
    %19 = arith.select %18, %c1_i32, %c8_i32 : i32
    %20 = vector.broadcast %19 : i32 to vector<16x32xi32>
    %21 = arith.remsi %17, %20 : vector<16x32xi32>
    %c0_i32_16 = arith.constant 0 : i32
    %22 = vector.broadcast %c0_i32_16 : i32 to vector<16x32xi32>
    %23 = arith.cmpi ne, %21, %22 : vector<16x32xi32>
    %c0_i32_17 = arith.constant 0 : i32
    %24 = vector.broadcast %c0_i32_17 : i32 to vector<16x32xi32>
    %25 = arith.cmpi slt, %21, %24 : vector<16x32xi32>
    %c0_i32_18 = arith.constant 0 : i32
    %26 = arith.cmpi slt, %19, %c0_i32_18 : i32
    %27 = vector.broadcast %26 : i1 to vector<16x32xi1>
    %28 = vector.broadcast %27 : vector<16x32xi1> to vector<16x32xi1>
    %29 = arith.xori %25, %28 : vector<16x32xi1>
    %30 = arith.andi %29, %23 : vector<16x32xi1>
    %31 = vector.broadcast %19 : i32 to vector<16x32xi32>
    %32 = arith.addi %21, %31 : vector<16x32xi32>
    %33 = arith.select %30, %32, %21 : vector<16x32xi1>, vector<16x32xi32>
    %c0_i32_19 = arith.constant 0 : i32
    %34 = vector.broadcast %c0_i32_19 : i32 to vector<16x32xi32>
    %35 = arith.cmpi eq, %33, %34 : vector<16x32xi32>
    %c1_i32_20 = arith.constant 1 : i32
    %36 = tpu.dynamic_rotate %12 by %c1_i32_20 dim 0 : vector<16x32xf32>, i32 -> vector<16x32xf32>
    %cst_21 = arith.constant 0.000000e+00 : f32
    %37 = vector.broadcast %cst_21 : f32 to vector<16x32xf32>
    %38 = arith.select %35, %37, %36 : vector<16x32xi1>, vector<16x32xf32>
    %c8_i32_22 = arith.constant 8 : i32
    %c0_i32_23 = arith.constant 0 : i32
    %39 = arith.cmpi eq, %c8_i32_22, %c0_i32_23 : i32
    %c1_i32_24 = arith.constant 1 : i32
    %40 = arith.select %39, %c1_i32_24, %c8_i32_22 : i32
    %41 = vector.broadcast %40 : i32 to vector<16x32xi32>
    %42 = arith.remsi %17, %41 : vector<16x32xi32>
    %c0_i32_25 = arith.constant 0 : i32
    %43 = vector.broadcast %c0_i32_25 : i32 to vector<16x32xi32>
    %44 = arith.cmpi ne, %42, %43 : vector<16x32xi32>
    %c0_i32_26 = arith.constant 0 : i32
    %45 = vector.broadcast %c0_i32_26 : i32 to vector<16x32xi32>
    %46 = arith.cmpi slt, %42, %45 : vector<16x32xi32>
    %c0_i32_27 = arith.constant 0 : i32
    %47 = arith.cmpi slt, %40, %c0_i32_27 : i32
    %48 = vector.broadcast %47 : i1 to vector<16x32xi1>
    %49 = vector.broadcast %48 : vector<16x32xi1> to vector<16x32xi1>
    %50 = arith.xori %46, %49 : vector<16x32xi1>
    %51 = arith.andi %50, %44 : vector<16x32xi1>
    %52 = vector.broadcast %40 : i32 to vector<16x32xi32>
    %53 = arith.addi %42, %52 : vector<16x32xi32>
    %54 = arith.select %51, %53, %42 : vector<16x32xi1>, vector<16x32xi32>
    %c7_i32 = arith.constant 7 : i32
    %55 = vector.broadcast %c7_i32 : i32 to vector<16x32xi32>
    %56 = arith.cmpi eq, %54, %55 : vector<16x32xi32>
    %c15_i32 = arith.constant 15 : i32
    %57 = tpu.dynamic_rotate %16 by %c15_i32 dim 0 : vector<16x32xf32>, i32 -> vector<16x32xf32>
    %cst_28 = arith.constant 0.000000e+00 : f32
    %58 = vector.broadcast %cst_28 : f32 to vector<16x32xf32>
    %59 = arith.select %56, %58, %57 : vector<16x32xi1>, vector<16x32xf32>
    %60 = arith.addf %14, %38 : vector<16x32xf32>
    %61 = arith.addf %60, %59 : vector<16x32xf32>
    %c0_29 = arith.constant 0 : index
    %c0_30 = arith.constant 0 : index
    %62 = vector.load %arg7[%c0_29, %c0_30] : memref<1x32xf32, #tpu.memory_space<vmem>>, vector<1x32xf32>
    %63 = vector.broadcast %62 : vector<1x32xf32> to vector<16x32xf32>
    %64 = arith.addf %61, %63 : vector<16x32xf32>
    %cst_31 = arith.constant 0.000000e+00 : f32
    %65 = vector.broadcast %cst_31 : f32 to vector<16x32xf32>
    %66 = arith.maximumf %64, %65 : vector<16x32xf32>
    %67 = arith.truncf %66 : vector<16x32xf32> to vector<16x32xbf16>
    %c0_32 = arith.constant 0 : index
    %c0_33 = arith.constant 0 : index
    %68 = vector.load %arg8[%c0_32, %c0_33] : memref<32x128xbf16, #tpu.memory_space<vmem>>, vector<32x128xbf16>
    %cst_34 = arith.constant dense<0.000000e+00> : vector<16x128xf32>
    %69 = tpu.matmul %67, %68, %cst_34 {dimension_numbers = #tpu.dot_dimension_numbers<[1], [0], [0], [1], [0, 0, 1, 1], [], []>} : vector<16x32xbf16>, vector<32x128xbf16>, vector<16x128xf32> -> vector<16x128xf32>
    %c0_35 = arith.constant 0 : index
    %c0_36 = arith.constant 0 : index
    %70 = vector.load %arg9[%c0_35, %c0_36] : memref<1x128xf32, #tpu.memory_space<vmem>>, vector<1x128xf32>
    %71 = vector.broadcast %70 : vector<1x128xf32> to vector<16x128xf32>
    %72 = arith.addf %69, %71 : vector<16x128xf32>
    %73 = arith.addf %72, %1 : vector<16x128xf32>
    %cst_37 = arith.constant 0.000000e+00 : f32
    %74 = vector.broadcast %cst_37 : f32 to vector<16x128xf32>
    %75 = arith.maximumf %73, %74 : vector<16x128xf32>
    %76 = vector.shape_cast %75 : vector<16x128xf32> to vector<2x8x128xf32>
    %c0_38 = arith.constant 0 : index
    %c0_39 = arith.constant 0 : index
    %c0_40 = arith.constant 0 : index
    %77 = vector.load %arg10[%c0_38, %c0_39, %c0_40] : memref<2x8x128xf32, #tpu.memory_space<vmem>>, vector<2x8x128xf32>
    tpu.vector_store %arg10[%c0_38, %c0_39, %c0_40], %76 {strides = array<i32>} : memref<2x8x128xf32, #tpu.memory_space<vmem>>, vector<2x8x128xf32>,
    return
  }
  func.func @transform_0(%arg0: i32) -> (i32, i32, i32) {
    %c0_i32 = arith.constant 0 : i32
    %c0_i32_0 = arith.constant 0 : i32
    %c0_i32_1 = arith.constant 0 : i32
    return %arg0, %c0_i32, %c0_i32_0 : i32, i32, i32
  }
  func.func @transform_1(%arg0: i32) -> (i32, i32) {
    %c0_i32 = arith.constant 0 : i32
    %c0_i32_0 = arith.constant 0 : i32
    %c0_i32_1 = arith.constant 0 : i32
    return %c0_i32, %c0_i32_0 : i32, i32
  }
  func.func @transform_2(%arg0: i32) -> (i32, i32) {
    %c0_i32 = arith.constant 0 : i32
    %c0_i32_0 = arith.constant 0 : i32
    %c0_i32_1 = arith.constant 0 : i32
    return %c0_i32, %c0_i32_0 : i32, i32
  }
  func.func @transform_3(%arg0: i32) -> (i32, i32) {
    %c0_i32 = arith.constant 0 : i32
    %c0_i32_0 = arith.constant 0 : i32
    %c0_i32_1 = arith.constant 0 : i32
    return %c0_i32, %c0_i32_0 : i32, i32
  }
  func.func @transform_4(%arg0: i32) -> (i32, i32) {
    %c0_i32 = arith.constant 0 : i32
    %c0_i32_0 = arith.constant 0 : i32
    %c0_i32_1 = arith.constant 0 : i32
    return %c0_i32, %c0_i32_0 : i32, i32
  }
  func.func @transform_5(%arg0: i32) -> (i32, i32) {
    %c0_i32 = arith.constant 0 : i32
    %c0_i32_0 = arith.constant 0 : i32
    %c0_i32_1 = arith.constant 0 : i32
    return %c0_i32, %c0_i32_0 : i32, i32
  }
  func.func @transform_6(%arg0: i32) -> (i32, i32) {
    %c0_i32 = arith.constant 0 : i32
    %c0_i32_0 = arith.constant 0 : i32
    %c0_i32_1 = arith.constant 0 : i32
    return %c0_i32, %c0_i32_0 : i32, i32
  }
  func.func @transform_7(%arg0: i32) -> (i32, i32) {
    %c0_i32 = arith.constant 0 : i32
    %c0_i32_0 = arith.constant 0 : i32
    %c0_i32_1 = arith.constant 0 : i32
    return %c0_i32, %c0_i32_0 : i32, i32
  }
  func.func @transform_8(%arg0: i32) -> (i32, i32) {
    %c0_i32 = arith.constant 0 : i32
    %c0_i32_0 = arith.constant 0 : i32
    %c0_i32_1 = arith.constant 0 : i32
    return %c0_i32, %c0_i32_0 : i32, i32
  }
  func.func @transform_9(%arg0: i32) -> (i32, i32, i32) {
    %c0_i32 = arith.constant 0 : i32
    %c0_i32_0 = arith.constant 0 : i32
    %c0_i32_1 = arith.constant 0 : i32
    return %arg0, %c0_i32, %c0_i32_0 : i32, i32, i32
  }
}

</mosaic_0001>

<llo_original>
// kernel: tpu_custom_call.1
$region0: #{tpu_custom_call.1}
  #allocation0 [shape = 'u32[]', space=smem, size = 0x4, offset = 0x4, fixed_abs, tag = 'smem constant byte address 0x4 - core index']
  #allocation1 [shape = 'u32[144,128]{1,0:T(1,128)}', space=vmem, size = 0x12000, scoped, tag = 'internal scratch']
  %s0 = inlined_call_operand.vmem [shape: f32[2,8,128], index: 0, kind: input, shape index: {}]
  %s1 = inlined_call_operand.vmem [shape: bf16[128,32], index: 1, kind: input, shape index: {}]
  %s2 = inlined_call_operand.vmem [shape: f32[1,32], index: 2, kind: input, shape index: {}]
  %s3 = inlined_call_operand.vmem [shape: bf16[32,32], index: 3, kind: input, shape index: {}]
  %s4 = inlined_call_operand.vmem [shape: bf16[32,32], index: 4, kind: input, shape index: {}]
  %s5 = inlined_call_operand.vmem [shape: bf16[32,32], index: 5, kind: input, shape index: {}]
  %s6 = inlined_call_operand.vmem [shape: f32[1,32], index: 6, kind: input, shape index: {}]
  %s7 = inlined_call_operand.vmem [shape: bf16[32,128], index: 7, kind: input, shape index: {}]
  %s8 = inlined_call_operand.vmem [shape: f32[1,128], index: 8, kind: input, shape index: {}]
  %s9 = inlined_call_operand.hbm [shape: f32[2,8,128], index: 9, kind: output, shape index: {}]
  %s10 = sld [smem:[#allocation0]]
  $region46: #{tpu_custom_call.1} parent=0
    _
  %s12 = ssub.s32 1, %s10
  %s13 = scalar_select 0, %s12, %s10
  $region1: #{tpu_custom_call.1} parent=0
    #allocation2 [shape = 'u8[8192]{0}', space=vmem, size = 0x2000, scoped, tag = 'output window, operand 0, single buffered']
    #allocation3 [shape = 's32[1]{0}', space=sflag, size = 0x4, scoped, tag = 'scoped memory for tpu_custom_call.1']
    %14 = vsyncpa [#allocation3], 0
    // Predicated region
    $region2: #{tpu_custom_call.1} parent=1 // pred_check
      _
    $region3: #{tpu_custom_call.1} parent=1 // pred_check_branch
      %16 = sbr.rel (0) target = $region5
    $region4: #{tpu_custom_call.1} parent=1 // pred_region
      _
    $region5: #{tpu_custom_call.1} parent=1 // pred_fallthru
      _
    // Predicated region
    $region6: #{tpu_custom_call.1} parent=1 // pred_check
      _
    $region7: #{tpu_custom_call.1} parent=1 // pred_check_branch
      %18 = sbr.rel (0) target = $region9
    $region8: #{tpu_custom_call.1} parent=1 // pred_region
      _
    $region9: #{tpu_custom_call.1} parent=1 // pred_fallthru
      _
    // Predicated region
    $region10: #{tpu_custom_call.1} parent=1 // pred_check
      _
    $region11: #{tpu_custom_call.1} parent=1 // pred_check_branch
      %20 = sbr.rel (0) target = $region13
    $region12: #{tpu_custom_call.1} parent=1 // pred_region
      _
    $region13: #{tpu_custom_call.1} parent=1 // pred_fallthru
      _
    // Predicated region
    $region14: #{tpu_custom_call.1} parent=1 // pred_check
      _
    $region15: #{tpu_custom_call.1} parent=1 // pred_check_branch
      %22 = sbr.rel (0) target = $region17
    $region16: #{tpu_custom_call.1} parent=1 // pred_region
      _
    $region17: #{tpu_custom_call.1} parent=1 // pred_fallthru
      _
    // Predicated region
    $region18: #{tpu_custom_call.1} parent=1 // pred_check
      _
    $region19: #{tpu_custom_call.1} parent=1 // pred_check_branch
      %24 = sbr.rel (0) target = $region21
    $region20: #{tpu_custom_call.1} parent=1 // pred_region
      _
    $region21: #{tpu_custom_call.1} parent=1 // pred_fallthru
      _
    // Predicated region
    $region22: #{tpu_custom_call.1} parent=1 // pred_check
      _
    $region23: #{tpu_custom_call.1} parent=1 // pred_check_branch
      %26 = sbr.rel (0) target = $region25
    $region24: #{tpu_custom_call.1} parent=1 // pred_region
      _
    $region25: #{tpu_custom_call.1} parent=1 // pred_fallthru
      _
    // Predicated region
    $region26: #{tpu_custom_call.1} parent=1 // pred_check
      _
    $region27: #{tpu_custom_call.1} parent=1 // pred_check_branch
      %28 = sbr.rel (0) target = $region29
    $region28: #{tpu_custom_call.1} parent=1 // pred_region
      _
    $region29: #{tpu_custom_call.1} parent=1 // pred_fallthru
      _
    // Predicated region
    $region30: #{tpu_custom_call.1} parent=1 // pred_check
      _
    $region31: #{tpu_custom_call.1} parent=1 // pred_check_branch
      %30 = sbr.rel (0) target = $region33
    $region32: #{tpu_custom_call.1} parent=1 // pred_region
      _
    $region33: #{tpu_custom_call.1} parent=1 // pred_fallthru
      _
    // Predicated region
    $region34: #{tpu_custom_call.1} parent=1 // pred_check
      _
    $region35: #{tpu_custom_call.1} parent=1 // pred_check_branch
      %32 = sbr.rel (0) target = $region37
    $region36: #{tpu_custom_call.1} parent=1 // pred_region
      _
    $region37: #{tpu_custom_call.1} parent=1 // pred_fallthru
      _
    %v34 = vld [vmem:[%s0] sm:$0xff]
    %v35 = vld [vmem:[%s0 + $0x8] sm:$0xff]
    %v36 = vpack.c.bf16 %v35, %v34
    %v37 = vld [vmem:[%s1] sm:$0xf]
    %v38 = vld [vmem:[%s1 + $0x4] sm:$0xf]
    %v39 = vld [vmem:[%s1 + $0x8] sm:$0xf]
    %v40 = vld [vmem:[%s1 + $0xc] sm:$0xf]
    %v41 = vld [vmem:[%s1 + $0x10] sm:$0xf]
    %v42 = vld [vmem:[%s1 + $0x14] sm:$0xf]
    %v43 = vld [vmem:[%s1 + $0x18] sm:$0xf]
    %v44 = vld [vmem:[%s1 + $0x1c] sm:$0xf]
    %v45 = vld [vmem:[%s1 + $0x20] sm:$0xf]
    %v46 = vld [vmem:[%s1 + $0x24] sm:$0xf]
    %v47 = vld [vmem:[%s1 + $0x28] sm:$0xf]
    %v48 = vld [vmem:[%s1 + $0x2c] sm:$0xf]
    %v49 = vld [vmem:[%s1 + $0x30] sm:$0xf]
    %v50 = vld [vmem:[%s1 + $0x34] sm:$0xf]
    %v51 = vld [vmem:[%s1 + $0x38] sm:$0xf]
    %v52 = vld [vmem:[%s1 + $0x3c] sm:$0xf]
    %v53 = vld [vmem:[%s2] sm:$0x1]
    %v55 = vlaneseq
    %v56 = vshrl.u32 %v55, 7
    %v57 = vsub.s32 0, %v56
    %v58 = vrot.slane %v53, %v57
    %v76 = vunpack.c.l.b16 %v37
    %v77 = vunpack.c.l.b16 %v38
    %v78 = vunpack.c.l.b16 %v39
    %v79 = vunpack.c.l.b16 %v40
    %v80 = vunpack.c.l.b16 %v41
    %v81 = vunpack.c.l.b16 %v42
    %v82 = vunpack.c.l.b16 %v43
    %v83 = vunpack.c.l.b16 %v44
    %v84 = vunpack.c.l.b16 %v45
    %v85 = vunpack.c.l.b16 %v46
    %v86 = vunpack.c.l.b16 %v47
    %v87 = vunpack.c.l.b16 %v48
    %v88 = vunpack.c.l.b16 %v49
    %v89 = vunpack.c.l.b16 %v50
    %v90 = vunpack.c.l.b16 %v51
    %v91 = vunpack.c.l.b16 %v52
    %v92 = vpack.c.b16 %v77, %v76
    %v93 = vpack.c.b16 %v79, %v78
    %v94 = vpack.c.b16 %v81, %v80
    %v95 = vpack.c.b16 %v83, %v82
    %v96 = vpack.c.b16 %v85, %v84
    %v97 = vpack.c.b16 %v87, %v86
    %v98 = vpack.c.b16 %v89, %v88
    %v99 = vpack.c.b16 %v91, %v90
    %108 = vmatprep.subr.bf16.mxu0 0
    %109 = vmatpush1.bf16.msra.mxu0 %v92
    %110 = vmatprep.subr.bf16.mxu0 0
    %111 = vmatpush1.bf16.msra.mxu0 %v93
    %112 = vmatprep.subr.bf16.mxu0 0
    %113 = vmatpush1.bf16.msra.mxu0 %v94
    %114 = vmatprep.subr.bf16.mxu0 0
    %115 = vmatpush1.bf16.msra.mxu0 %v95
    %116 = vmatprep.subr.bf16.mxu0 0
    %117 = vmatpush1.bf16.msra.mxu0 %v96
    %118 = vmatprep.subr.bf16.mxu0 0
    %119 = vmatpush1.bf16.msra.mxu0 %v97
    %120 = vmatprep.subr.bf16.mxu0 0
    %121 = vmatpush1.bf16.msra.mxu0 %v98
    %122 = vmatprep.subr.bf16.mxu0 0
    %123 = vmatpush1.bf16.msra.mxu0 %v99
    %124 = vmatprep.subr.bf16.mxu0 0
    %125 = vmatpush1.bf16.msra.mxu0 0
    %126 = vmatprep.subr.bf16.mxu0 0
    %127 = vmatpush1.bf16.msra.mxu0 0
    %128 = vmatprep.subr.bf16.mxu0 0
    %129 = vmatpush1.bf16.msra.mxu0 0
    %130 = vmatprep.subr.bf16.mxu0 0
    %131 = vmatpush1.bf16.msra.mxu0 0
    %132 = vmatprep.subr.bf16.mxu0 0
    %133 = vmatpush1.bf16.msra.mxu0 0
    %134 = vmatprep.subr.bf16.mxu0 0
    %135 = vmatpush1.bf16.msra.mxu0 0
    %136 = vmatprep.subr.bf16.mxu0 0
    %137 = vmatpush1.bf16.msra.mxu0 0
    %138 = vmatprep.subr.bf16.mxu0 0
    %139 = vmatpush1.bf16.msra.mxu0 0
    %140 = vmatprep.mubr.bf16.mxu0 0
    %141 = vmatmul.mubr.bf16.gmra.mrb[0].mxu0 %v36
    %v142 = vpop.f32.mrb[0].mxu0
    %v143 = vadd.f32 %v58, %v142
    %v144 = vpop.f32.mrb[0].mxu0
    %v145 = vpop.f32.mrb[0].mxu0
    %v146 = vadd.f32 %v58, %v145
    %v147 = vpop.f32.mrb[0].mxu0
    %148 = vdwg.mxu0
    %v149 = vmax.f32 %v143, 0.0
    %v150 = vmax.f32 %v146, 0.0
    %v151 = vpack.c.bf16 %v150, %v149
    %v152 = vld [vmem:[%s3] sm:$0xf]
    %v153 = vld [vmem:[%s3 + $0x4] sm:$0xf]
    %v154 = vld [vmem:[%s3 + $0x8] sm:$0xf]
    %v155 = vld [vmem:[%s3 + $0xc] sm:$0xf]
    %v160 = vunpack.c.l.b16 %v152
    %v161 = vunpack.c.l.b16 %v153
    %v162 = vunpack.c.l.b16 %v154
    %v163 = vunpack.c.l.b16 %v155
    %v164 = vpack.c.b16 %v161, %v160
    %v165 = vpack.c.b16 %v163, %v162
    %vm168 = vcmask 261120
    %v170 = vsel %vm168, %v151, 0
    %172 = vmatprep.subr.bf16.mxu0 0
    %173 = vmatpush1.bf16.msra.mxu0 %v164
    %174 = vmatprep.subr.bf16.mxu0 0
    %175 = vmatpush1.bf16.msra.mxu0 %v165
    %176 = vmatprep.subr.bf16.mxu0 0
    %177 = vmatpush1.bf16.msra.mxu0 0
    %178 = vmatprep.subr.bf16.mxu0 0
    %179 = vmatpush1.bf16.msra.mxu0 0
    %180 = vmatprep.subr.bf16.mxu0 0
    %181 = vmatpush1.bf16.msra.mxu0 0
    %182 = vmatprep.subr.bf16.mxu0 0
    %183 = vmatpush1.bf16.msra.mxu0 0
    %184 = vmatprep.subr.bf16.mxu0 0
    %185 = vmatpush1.bf16.msra.mxu0 0
    %186 = vmatprep.subr.bf16.mxu0 0
    %187 = vmatpush1.bf16.msra.mxu0 0
    %188 = vmatprep.subr.bf16.mxu0 0
    %189 = vmatpush1.bf16.msra.mxu0 0
    %190 = vmatprep.subr.bf16.mxu0 0
    %191 = vmatpush1.bf16.msra.mxu0 0
    %192 = vmatprep.subr.bf16.mxu0 0
    %193 = vmatpush1.bf16.msra.mxu0 0
    %194 = vmatprep.subr.bf16.mxu0 0
    %195 = vmatpush1.bf16.msra.mxu0 0
    %196 = vmatprep.subr.bf16.mxu0 0
    %197 = vmatpush1.bf16.msra.mxu0 0
    %198 = vmatprep.subr.bf16.mxu0 0
    %199 = vmatpush1.bf16.msra.mxu0 0
    %200 = vmatprep.subr.bf16.mxu0 0
    %201 = vmatpush1.bf16.msra.mxu0 0
    %202 = vmatprep.subr.bf16.mxu0 0
    %203 = vmatpush1.bf16.msra.mxu0 0
    %204 = vmatprep.mubr.bf16.mxu0 0
    %205 = vmatmul.mubr.bf16.gmra.mrb[0].mxu0 %v170
    %v206 = vpop.f32.mrb[0].mxu0
    %v207 = vadd.f32 0.0, %v206
    %v208 = vpop.f32.mrb[0].mxu0
    %v209 = vpop.f32.mrb[0].mxu0
    %v210 = vadd.f32 0.0, %v209
    %v211 = vpop.f32.mrb[0].mxu0
    %212 = vdwg.mxu0
    %v213 = vld [vmem:[%s4] sm:$0xf]
    %v214 = vld [vmem:[%s4 + $0x4] sm:$0xf]
    %v215 = vld [vmem:[%s4 + $0x8] sm:$0xf]
    %v216 = vld [vmem:[%s4 + $0xc] sm:$0xf]
    %v217 = vld [vmem:[%s5] sm:$0xf]
    %v218 = vld [vmem:[%s5 + $0x4] sm:$0xf]
    %v219 = vld [vmem:[%s5 + $0x8] sm:$0xf]
    %v220 = vld [vmem:[%s5 + $0xc] sm:$0xf]
    %v225 = vunpack.c.l.b16 %v217
    %v226 = vunpack.c.l.b16 %v218
    %v227 = vunpack.c.l.b16 %v219
    %v228 = vunpack.c.l.b16 %v220
    %v229 = vpack.c.b16 %v226, %v225
    %v230 = vpack.c.b16 %v228, %v227
    %233 = vmatprep.subr.bf16.mxu0 0
    %234 = vmatpush1.bf16.msra.mxu0 %v229
    %235 = vmatprep.subr.bf16.mxu0 0
    %236 = vmatpush1.bf16.msra.mxu0 %v230
    %237 = vmatprep.subr.bf16.mxu0 0
    %238 = vmatpush1.bf16.msra.mxu0 0
    %239 = vmatprep.subr.bf16.mxu0 0
    %240 = vmatpush1.bf16.msra.mxu0 0
    %241 = vmatprep.subr.bf16.mxu0 0
    %242 = vmatpush1.bf16.msra.mxu0 0
    %243 = vmatprep.subr.bf16.mxu0 0
    %244 = vmatpush1.bf16.msra.mxu0 0
    %245 = vmatprep.subr.bf16.mxu0 0
    %246 = vmatpush1.bf16.msra.mxu0 0
    %247 = vmatprep.subr.bf16.mxu0 0
    %248 = vmatpush1.bf16.msra.mxu0 0
    %249 = vmatprep.subr.bf16.mxu0 0
    %250 = vmatpush1.bf16.msra.mxu0 0
    %251 = vmatprep.subr.bf16.mxu0 0
    %252 = vmatpush1.bf16.msra.mxu0 0
    %253 = vmatprep.subr.bf16.mxu0 0
    %254 = vmatpush1.bf16.msra.mxu0 0
    %255 = vmatprep.subr.bf16.mxu0 0
    %256 = vmatpush1.bf16.msra.mxu0 0
    %257 = vmatprep.subr.bf16.mxu0 0
    %258 = vmatpush1.bf16.msra.mxu0 0
    %259 = vmatprep.subr.bf16.mxu0 0
    %260 = vmatpush1.bf16.msra.mxu0 0
    %261 = vmatprep.subr.bf16.mxu0 0
    %262 = vmatpush1.bf16.msra.mxu0 0
    %263 = vmatprep.subr.bf16.mxu0 0
    %264 = vmatpush1.bf16.msra.mxu0 0
    %265 = vmatprep.mubr.bf16.mxu0 0
    %266 = vmatmul.mubr.bf16.gmra.mrb[0].mxu0 %v170
    %v267 = vpop.f32.mrb[0].mxu0
    %v268 = vadd.f32 0.0, %v267
    %v269 = vpop.f32.mrb[0].mxu0
    %v270 = vpop.f32.mrb[0].mxu0
    %v271 = vadd.f32 0.0, %v270
    %v272 = vpop.f32.mrb[0].mxu0
    %273 = vdwg.mxu0
    %v274 = vlaneseq
    %v275 = vshrl.u32 %v274, 7
    %v276 = vadd.s32 %v275, 8
    %vm277 = vcmp.lt.s32.totalorder %v275, 0
    %v278 = vsub.s32 0, %v275
    %v279 = vsel %vm277, %v278, %v275
    %v280 = vshrl.u32 %v279, 3
    %v281 = vand.u32 %v279, 7
    %v282 = vsub.s32 0, %v281
    %v283 = vsel %vm277, %v282, %v281
    %vm284 = vcmp.lt.s32.totalorder %v276, 0
    %v285 = vsub.s32 0, %v276
    %v286 = vsel %vm284, %v285, %v276
    %v287 = vshrl.u32 %v286, 3
    %v288 = vand.u32 %v286, 7
    %v289 = vsub.s32 0, %v288
    %v290 = vsel %vm284, %v289, %v288
    %vm291 = vcmp.ne.s32.totalorder %v283, 0
    %vm292 = vcmp.ne.s32.totalorder %v290, 0
    %vm293 = vcmp.lt.s32.totalorder %v283, 0
    %vm294 = vcmp.lt.s32.totalorder %v290, 0
    %vm295 = vmand %vm293, %vm291
    %vm296 = vmand %vm294, %vm292
    %v297 = vadd.s32 %v283, 8
    %v298 = vadd.s32 %v290, 8
    %v299 = vsel %vm295, %v297, %v283
    %v300 = vsel %vm296, %v298, %v290
    %vm301 = vcmp.eq.s32.totalorder %v299, 0
    %vm302 = vcmp.eq.s32.totalorder %v300, 0
    %v303 = vrot.slane %v207, 7
    %v304 = vrot.slane %v210, 7
    %vm305 = vcmp.lt.s32.totalorder %v275, 1
    %v306 = vsel %vm305, %v303, %v304
    %v307 = vsel %vm305, %v304, %v303
    %v308 = vsel %vm301, 0.0, %v307
    %v309 = vsel %vm302, 0.0, %v306
    %vm310 = vcmp.eq.s32.totalorder %v299, 7
    %vm311 = vcmp.eq.s32.totalorder %v300, 7
    %v312 = vrot.slane %v268, 1
    %v313 = vrot.slane %v271, 1
    %vm314 = vcmp.lt.s32.totalorder %v275, 7
    %v315 = vsel %vm314, %v312, %v313
    %v316 = vsel %vm314, %v313, %v312
    %v317 = vsel %vm310, 0.0, %v315
    %v318 = vsel %vm311, 0.0, %v316
    %v323 = vunpack.c.l.b16 %v213
    %v324 = vunpack.c.l.b16 %v214
    %v325 = vunpack.c.l.b16 %v215
    %v326 = vunpack.c.l.b16 %v216
    %v327 = vpack.c.b16 %v324, %v323
    %v328 = vpack.c.b16 %v326, %v325
    %331 = vmatprep.subr.bf16.mxu0 0
    %332 = vmatpush1.bf16.msra.mxu0 %v327
    %333 = vmatprep.subr.bf16.mxu0 0
    %334 = vmatpush1.bf16.msra.mxu0 %v328
    %335 = vmatprep.subr.bf16.mxu0 0
    %336 = vmatpush1.bf16.msra.mxu0 0
    %337 = vmatprep.subr.bf16.mxu0 0
    %338 = vmatpush1.bf16.msra.mxu0 0
    %339 = vmatprep.subr.bf16.mxu0 0
    %340 = vmatpush1.bf16.msra.mxu0 0
    %341 = vmatprep.subr.bf16.mxu0 0
    %342 = vmatpush1.bf16.msra.mxu0 0
    %343 = vmatprep.subr.bf16.mxu0 0
    %344 = vmatpush1.bf16.msra.mxu0 0
    %345 = vmatprep.subr.bf16.mxu0 0
    %346 = vmatpush1.bf16.msra.mxu0 0
    %347 = vmatprep.subr.bf16.mxu0 0
    %348 = vmatpush1.bf16.msra.mxu0 0
    %349 = vmatprep.subr.bf16.mxu0 0
    %350 = vmatpush1.bf16.msra.mxu0 0
    %351 = vmatprep.subr.bf16.mxu0 0
    %352 = vmatpush1.bf16.msra.mxu0 0
    %353 = vmatprep.subr.bf16.mxu0 0
    %354 = vmatpush1.bf16.msra.mxu0 0
    %355 = vmatprep.subr.bf16.mxu0 0
    %356 = vmatpush1.bf16.msra.mxu0 0
    %357 = vmatprep.subr.bf16.mxu0 0
    %358 = vmatpush1.bf16.msra.mxu0 0
    %359 = vmatprep.subr.bf16.mxu0 0
    %360 = vmatpush1.bf16.msra.mxu0 0
    %361 = vmatprep.subr.bf16.mxu0 0
    %362 = vmatpush1.bf16.msra.mxu0 0
    %363 = vmatprep.mubr.bf16.mxu0 0
    %364 = vmatmul.mubr.bf16.gmra.mrb[0].mxu0 %v170
    %v365 = vpop.f32.mrb[0].mxu0
    %v366 = vadd.f32 %v308, %v365
    %v367 = vpop.f32.mrb[0].mxu0
    %v368 = vpop.f32.mrb[0].mxu0
    %v369 = vadd.f32 %v309, %v368
    %v370 = vpop.f32.mrb[0].mxu0
    %371 = vdwg.mxu0
    %v372 = vadd.f32 %v366, %v317
    %v373 = vadd.f32 %v369, %v318
    %v374 = vld [vmem:[%s6] sm:$0x1]
    %v376 = vlaneseq
    %v377 = vshrl.u32 %v376, 7
    %v378 = vsub.s32 0, %v377
    %v379 = vrot.slane %v374, %v378
    %v381 = vadd.f32 %v372, %v379
    %v382 = vadd.f32 %v373, %v379
    %v383 = vmax.f32 %v381, 0.0
    %v384 = vmax.f32 %v382, 0.0
    %v385 = vpack.c.bf16 %v384, %v383
    %v386 = vld [vmem:[%s7] sm:$0xf]
    %v387 = vld [vmem:[%s7 + $0x4] sm:$0xf]
    %v388 = vld [vmem:[%s7 + $0x8] sm:$0xf]
    %v389 = vld [vmem:[%s7 + $0xc] sm:$0xf]
    %v390 = vld [vmem:[%s8] sm:$0x1]
    %v392 = vlaneseq
    %v393 = vshrl.u32 %v392, 7
    %v394 = vsub.s32 0, %v393
    %v395 = vrot.slane %v390, %v394
    %v401 = vunpack.c.l.b16 %v386
    %v402 = vunpack.c.l.b16 %v387
    %v403 = vunpack.c.l.b16 %v388
    %v404 = vunpack.c.l.b16 %v389
    %v405 = vpack.c.b16 %v402, %v401
    %v406 = vpack.c.b16 %v404, %v403
    %v410 = vsel %vm168, %v385, 0
    %412 = vmatprep.subr.bf16.mxu0 0
    %413 = vmatpush1.bf16.msra.mxu0 %v405
    %414 = vmatprep.subr.bf16.mxu0 0
    %415 = vmatpush1.bf16.msra.mxu0 %v406
    %416 = vmatprep.subr.bf16.mxu0 0
    %417 = vmatpush1.bf16.msra.mxu0 0
    %418 = vmatprep.subr.bf16.mxu0 0
    %419 = vmatpush1.bf16.msra.mxu0 0
    %420 = vmatprep.subr.bf16.mxu0 0
    %421 = vmatpush1.bf16.msra.mxu0 0
    %422 = vmatprep.subr.bf16.mxu0 0
    %423 = vmatpush1.bf16.msra.mxu0 0
    %424 = vmatprep.subr.bf16.mxu0 0
    %425 = vmatpush1.bf16.msra.mxu0 0
    %426 = vmatprep.subr.bf16.mxu0 0
    %427 = vmatpush1.bf16.msra.mxu0 0
    %428 = vmatprep.subr.bf16.mxu0 0
    %429 = vmatpush1.bf16.msra.mxu0 0
    %430 = vmatprep.subr.bf16.mxu0 0
    %431 = vmatpush1.bf16.msra.mxu0 0
    %432 = vmatprep.subr.bf16.mxu0 0
    %433 = vmatpush1.bf16.msra.mxu0 0
    %434 = vmatprep.subr.bf16.mxu0 0
    %435 = vmatpush1.bf16.msra.mxu0 0
    %436 = vmatprep.subr.bf16.mxu0 0
    %437 = vmatpush1.bf16.msra.mxu0 0
    %438 = vmatprep.subr.bf16.mxu0 0
    %439 = vmatpush1.bf16.msra.mxu0 0
    %440 = vmatprep.subr.bf16.mxu0 0
    %441 = vmatpush1.bf16.msra.mxu0 0
    %442 = vmatprep.subr.bf16.mxu0 0
    %443 = vmatpush1.bf16.msra.mxu0 0
    %444 = vmatprep.mubr.bf16.mxu0 0
    %445 = vmatmul.mubr.bf16.gmra.mrb[0].mxu0 %v410
    %v446 = vpop.f32.mrb[0].mxu0
    %v447 = vadd.f32 %v395, %v446
    %v448 = vpop.f32.mrb[0].mxu0
    %v449 = vpop.f32.mrb[0].mxu0
    %v450 = vadd.f32 %v395, %v449
    %v451 = vpop.f32.mrb[0].mxu0
    %452 = vdwg.mxu0
    %v453 = vadd.f32 %v447, %v34
    %v454 = vadd.f32 %v450, %v35
    %v455 = vmax.f32 %v453, 0.0
    %v456 = vmax.f32 %v454, 0.0
    %457 = vst [vmem:[#allocation2] sm:$0xff] %v455
    %458 = vst [vmem:[#allocation2 + $0x8] sm:$0xff] %v456
    // Predicated region
    $region38: #{tpu_custom_call.1} parent=1 // pred_check
      _
    $region39: #{tpu_custom_call.1} parent=1 // pred_check_branch
      %460 = sbr.rel (0) target = $region41
    $region40: #{tpu_custom_call.1} parent=1 // pred_region
      %s462 = ssub.s32 256, 256
      %463 = vsyncadd [#allocation3], %s462
      %s464 = sshll.u32 [#allocation2], 4
      %s465 = int_to_ptr.vmem [resolvable:$true] %s464
      %470 = dma.vmem_to_hbm [thread:$0]  %s465, 256, %s9, [#allocation3], 128, 128, 8
    $region41: #{tpu_custom_call.1} parent=1 // pred_fallthru
      _
    // Predicated region
    $region42: #{tpu_custom_call.1} parent=1 // pred_check
      _
    $region43: #{tpu_custom_call.1} parent=1 // pred_check_branch
      %472 = sbr.rel (0) target = $region45
    $region44: #{tpu_custom_call.1} parent=1 // pred_region
      %473 = dma.done [#allocation3], 256
    $region45: #{tpu_custom_call.1} parent=1 // pred_fallthru
      _
    %474 = vsyncpa [#allocation3], 1

</llo_original>
